<compile_context>
chip_gen: v6e
topology: v6e:2x2x1
jax: 0.10.0
libtpu: 0.0.40
codegen_flags: <defaults>
</compile_context>

<pallas_src>
import functools

import jax
import jax.numpy as jnp
from jax.experimental import pallas as pl
from jax.experimental.pallas import tpu as pltpu

_LANE = 128   # lane width (last dim of a vreg)
_SUB = 8      # f32 sublane count (second-to-last dim of a vreg)


def _round_up(x, m):
    return (x + m - 1) // m * m


def _temporal_block_kernel(*refs, TB, L, p, p_pad, d, K, has_downsample):
    """Fused TemporalBlock for one tile of TB batch elements.

    refs (downsample):   xpad, w1, b1, w2, b2, wd, bd, o, hpad_scratch
    refs (identity res): xpad, w1, b1, w2, b2, o, hpad_scratch

    xpad : (TB, p_pad + L, Cin_p)  bf16, causally left-padded (first p_pad rows 0)
    w1   : (K, Cin_p, Cout_p)      bf16, tap-major weight-normed conv1 weight
    b1   : (1, Cout_p)             f32
    w2   : (K, Cout_p, Cout_p)     bf16
    b2   : (1, Cout_p)             f32
    wd   : (Cin_p, Cout_p)         bf16 1x1 downsample; bd: (1, Cout_p) f32
    o    : (TB, L, Cout_p)         f32, lane-dense (Cout_p multiple of 128)
    hpad : (TB, p_pad + L, Cout_p) VMEM scratch: conv2's causally padded input
    """
    if has_downsample:
        (xpad_ref, w1_ref, b1_ref, w2_ref, b2_ref,
         wd_ref, bd_ref, o_ref, hpad_ref) = refs
    else:
        (xpad_ref, w1_ref, b1_ref, w2_ref, b2_ref, o_ref, hpad_ref) = refs
        wd_ref = bd_ref = None

    Cin_p = xpad_ref.shape[2]
    Cout_p = w1_ref.shape[2]
    M = TB * L            # batch tile folded into the MXU M dimension
    off0 = p_pad - p      # extra (alignment-only) rows beyond the causal pad p

    # ---- conv1 (causal, dilated) + bias + ReLU --------------------------------
    acc1 = jnp.zeros((M, Cout_p), jnp.float32)
    for j in range(K):    # static unroll over kernel taps (K is small, e.g. 3)
        xs = xpad_ref[:, pl.ds(off0 + j * d, L), :]          # (TB, L, Cin_p) bf16
        acc1 += jnp.dot(xs.reshape(M, Cin_p), w1_ref[j],
                        preferred_element_type=jnp.float32)
    h = jnp.maximum(acc1 + b1_ref[...], 0.0)                 # f32 on VPU
    # dropout1: identity (eval mode)

    # ---- stage h (compute dtype) into an aligned, causally padded scratch -----
    # The p_pad-row zero prefix is rewritten every step: it is a small aligned,
    # unmasked store, and a pl.when(program_id == 0) one-time guard would be
    # unsafe under megacore "parallel" sharding (each core has its own scratch
    # and only one core ever executes step 0).
    if p_pad > 0:
        hpad_ref[:, pl.ds(0, p_pad), :] = jnp.zeros(
            (TB, p_pad, Cout_p), hpad_ref.dtype)
    hpad_ref[:, pl.ds(p_pad, L), :] = (
        h.astype(hpad_ref.dtype).reshape(TB, L, Cout_p))

    # ---- conv2 (causal, dilated) + bias + ReLU --------------------------------
    acc2 = jnp.zeros((M, Cout_p), jnp.float32)
    for j in range(K):
        hs = hpad_ref[:, pl.ds(off0 + j * d, L), :]          # (TB, L, Cout_p)
        acc2 += jnp.dot(hs.reshape(M, Cout_p), w2_ref[j],
                        preferred_element_type=jnp.float32)
    out2 = jnp.maximum(acc2 + b2_ref[...], 0.0)
    # dropout2: identity (eval mode)

    # ---- residual branch (1x1 conv or identity) + final ReLU ------------------
    x_res = xpad_ref[:, pl.ds(p_pad, L), :].reshape(M, Cin_p)   # aligned slice
    if has_downsample:
        res = jnp.dot(x_res, wd_ref[...],
                      preferred_element_type=jnp.float32) + bd_ref[...]
    else:
        # in_channels == out_channels: skip the identity 1x1 matmul entirely.
        res = x_res.astype(jnp.float32)

    y = jnp.maximum(out2 + res, 0.0)
    o_ref[...] = y.reshape(TB, L, Cout_p).astype(o_ref.dtype)


def temporal_block_forward(x_ncl, w1, b1, w2, b2, wd=None, bd=None, *,
                           dilation, compute_dtype=jnp.bfloat16):
    """TemporalBlock forward.

    x_ncl : (N, Cin, L) float32 in PyTorch NCL layout.
    w1    : (K, Cin, Cout)  effective (weight-normed) conv1 weight, tap-major.
    b1    : (Cout,)
    w2    : (K, Cout, Cout) effective conv2 weight, tap-major.
    b2    : (Cout,)
    wd,bd : optional 1x1 downsample conv (Cin, Cout), (Cout,); None => identity.
    Returns (N, Cout, L) float32 (PyTorch layout).
    """
    N, Cin, L = x_ncl.shape
    K, _, Cout = w1.shape
    d = int(dilation)
    p = (K - 1) * d                      # causal padding == chomp size
    has_downsample = wd is not None
    if not has_downsample:
        assert Cin == Cout, "identity residual requires in_channels == out_channels"

    # Lane-dense channel padding + sublane-tile-aligned time padding.
    Cin_p = _round_up(Cin, _LANE)
    Cout_p = _round_up(Cout, _LANE)
    sub = _SUB * (4 // jnp.dtype(compute_dtype).itemsize)   # 8 for f32, 16 for bf16
    Lk = _round_up(L, sub)
    p_pad = _round_up(p, sub) if p > 0 else 0

    # Batch tile: fold enough batch elements into the matmul M dim (~512 rows),
    # while keeping each per-step VMEM buffer (input block + output block +
    # scratch) under a few MiB so the double-buffered pipeline never OOMs VMEM.
    bytes_per_batch = ((p_pad + Lk) * Cin_p * 2          # xpad block (bf16)
                       + Lk * Cout_p * 4                 # output block (f32)
                       + (p_pad + Lk) * Cout_p * 2)      # scratch (bf16)
    TB_vmem = max(1, (8 * 1024 * 1024) // max(1, bytes_per_batch))
    TB = max(1, min(N, -(-512 // Lk), TB_vmem))
    N_pad = _round_up(N, TB)
    NB = N_pad // TB

    # Layout glue (plain JAX): NCL -> NLC, zero-pad batch/time/channels, cast MXU
    # operands to bf16 once (halves input HBM traffic vs f32).
    x_nlc = jnp.transpose(x_ncl, (0, 2, 1))
    xpad = jnp.pad(x_nlc.astype(compute_dtype),
                   ((0, N_pad - N), (p_pad, Lk - L), (0, Cin_p - Cin)))

    w1p = jnp.pad(w1, ((0, 0), (0, Cin_p - Cin), (0, Cout_p - Cout))
                  ).astype(compute_dtype)
    w2p = jnp.pad(w2, ((0, 0), (0, Cout_p - Cout), (0, Cout_p - Cout))
                  ).astype(compute_dtype)
    b1p = jnp.pad(b1.reshape(1, Cout), ((0, 0), (0, Cout_p - Cout))
                  ).astype(jnp.float32)
    b2p = jnp.pad(b2.reshape(1, Cout), ((0, 0), (0, Cout_p - Cout))
                  ).astype(jnp.float32)

    inputs = [xpad, w1p, b1p, w2p, b2p]
    in_specs = [
        pl.BlockSpec((TB, p_pad + Lk, Cin_p), lambda b: (b, 0, 0)),
        pl.BlockSpec((K, Cin_p, Cout_p), lambda b: (0, 0, 0)),
        pl.BlockSpec((1, Cout_p), lambda b: (0, 0)),
        pl.BlockSpec((K, Cout_p, Cout_p), lambda b: (0, 0, 0)),
        pl.BlockSpec((1, Cout_p), lambda b: (0, 0)),
    ]
    if has_downsample:
        wdp = jnp.pad(wd, ((0, Cin_p - Cin), (0, Cout_p - Cout))
                      ).astype(compute_dtype)
        bdp = jnp.pad(bd.reshape(1, Cout), ((0, 0), (0, Cout_p - Cout))
                      ).astype(jnp.float32)
        inputs += [wdp, bdp]
        in_specs += [
            pl.BlockSpec((Cin_p, Cout_p), lambda b: (0, 0)),
            pl.BlockSpec((1, Cout_p), lambda b: (0, 0)),
        ]

    kernel = functools.partial(
        _temporal_block_kernel, TB=TB, L=Lk, p=p, p_pad=p_pad, d=d, K=K,
        has_downsample=has_downsample)

    out = pl.pallas_call(
        kernel,
        out_shape=jax.ShapeDtypeStruct((N_pad, Lk, Cout_p), jnp.float32),
        grid_spec=pltpu.PrefetchScalarGridSpec(
            num_scalar_prefetch=0,
            grid=(NB,),
            in_specs=in_specs,
            out_specs=pl.BlockSpec((TB, Lk, Cout_p), lambda b: (b, 0, 0)),
            scratch_shapes=[pltpu.VMEM((TB, p_pad + Lk, Cout_p), compute_dtype)],
        ),
        compiler_params=pltpu.CompilerParams(
            dimension_semantics=("parallel",),
            vmem_limit_bytes=48 * 1024 * 1024),
    )(*inputs)

    # Glue: strip padding, NLC -> NCL to match the PyTorch output layout.
    return jnp.transpose(out[:N, :L, :Cout], (0, 2, 1))


def _weight_norm(v, g):
    """PyTorch weight_norm (dim=0) on a Conv1d weight v of shape (Cout, Cin, K)."""
    norm = jnp.sqrt(jnp.sum(v * v, axis=(1, 2), keepdims=True))
    return g.reshape(-1, 1, 1) * v / norm


def _reference_forward(x_ncl, w1, b1, w2, b2, wd=None, bd=None, *,
                       dilation, operand_dtype=jnp.float32):
    """Pure-JAX reference. `operand_dtype` emulates the kernel's MXU operand
    rounding (bf16 operands, f32 accumulation) so the comparison isolates kernel
    correctness from the intended low-precision operand choice."""
    N, Cin, L = x_ncl.shape
    K, _, Cout = w1.shape
    d = dilation
    p = (K - 1) * d
    rnd = lambda a: a.astype(operand_dtype).astype(jnp.float32)

    def causal_conv(x_tlc, w, b):
        xp = jnp.pad(rnd(x_tlc), ((0, 0), (p, 0), (0, 0)))
        y = sum(jnp.einsum('nlc,cd->nld', xp[:, j * d:j * d + L, :], rnd(w[j]))
                for j in range(K))
        return y + b.reshape(1, 1, -1)

    x_tlc = jnp.transpose(x_ncl, (0, 2, 1)).astype(jnp.float32)
    h = jnp.maximum(causal_conv(x_tlc, w1, b1), 0.0)
    out = jnp.maximum(causal_conv(h, w2, b2), 0.0)
    if wd is None:
        res = rnd(x_tlc)
    else:
        res = jnp.einsum('nlc,cd->nld', rnd(x_tlc), rnd(wd)) + bd.reshape(1, 1, -1)
    y = jnp.maximum(out + res, 0.0)
    return jnp.transpose(y, (0, 2, 1))


if __name__ == "__main__":
    key = jax.random.PRNGKey(0)
    ks = jax.random.split(key, 16)
    kernel_size = 3  # stride = 1; padding = (kernel_size - 1) * dilation (causal)

    # ----- case 1: in_channels != out_channels (1x1 downsample residual) -------
    N, Cin, Cout, L, dilation = 2, 4, 8, 16, 2
    v1 = 0.01 * jax.random.normal(ks[0], (Cout, Cin, kernel_size), jnp.float32)
    g1 = 1.0 + 0.1 * jax.random.normal(ks[1], (Cout,), jnp.float32)
    b1 = 0.01 * jax.random.normal(ks[2], (Cout,), jnp.float32)
    v2 = 0.01 * jax.random.normal(ks[3], (Cout, Cout, kernel_size), jnp.float32)
    g2 = 1.0 + 0.1 * jax.random.normal(ks[4], (Cout,), jnp.float32)
    b2 = 0.01 * jax.random.normal(ks[5], (Cout,), jnp.float32)
    Wd = 0.01 * jax.random.normal(ks[6], (Cout, Cin, 1), jnp.float32)
    bd = 0.01 * jax.random.normal(ks[7], (Cout,), jnp.float32)
    x = jax.random.normal(ks[8], (N, Cin, L), jnp.float32)

    # Effective (weight-normed) weights -> kernel layout (K, Cin, Cout).
    w1_k = jnp.transpose(_weight_norm(v1, g1), (2, 1, 0))
    w2_k = jnp.transpose(_weight_norm(v2, g2), (2, 1, 0))
    wd_k = Wd[:, :, 0].T                                    # (Cin, Cout)

    y = temporal_block_forward(x, w1_k, b1, w2_k, b2, wd_k, bd, dilation=dilation)
    y = jax.block_until_ready(y)
    y_ref = _reference_forward(x, w1_k, b1, w2_k, b2, wd_k, bd,
                               dilation=dilation, operand_dtype=jnp.bfloat16)
    assert y.shape == (N, Cout, L)
    assert jnp.allclose(y, y_ref, atol=2e-3, rtol=2e-3), "case 1 mismatch"

    # ----- case 2: in_channels == out_channels (identity residual path) --------
    N2, C2, L2, dil2 = 3, 8, 20, 1
    v1b = 0.01 * jax.random.normal(ks[9], (C2, C2, kernel_size), jnp.float32)
    g1b = 1.0 + 0.1 * jax.random.normal(ks[10], (C2,), jnp.float32)
    b1b = 0.01 * jax.random.normal(ks[11], (C2,), jnp.float32)
    v2b = 0.01 * jax.random.normal(ks[12], (C2, C2, kernel_size), jnp.float32)
    g2b = 1.0 + 0.1 * jax.random.normal(ks[13], (C2,), jnp.float32)
    b2b = 0.01 * jax.random.normal(ks[14], (C2,), jnp.float32)
    x2 = jax.random.normal(ks[15], (N2, C2, L2), jnp.float32)

    w1b_k = jnp.transpose(_weight_norm(v1b, g1b), (2, 1, 0))
    w2b_k = jnp.transpose(_weight_norm(v2b, g2b), (2, 1, 0))

    y2 = temporal_block_forward(x2, w1b_k, b1b, w2b_k, b2b, dilation=dil2)
    y2 = jax.block_until_ready(y2)
    y2_ref = _reference_forward(x2, w1b_k, b1b, w2b_k, b2b,
                                dilation=dil2, operand_dtype=jnp.bfloat16)
    assert y2.shape == (N2, C2, L2)
    assert jnp.allclose(y2, y2_ref, atol=2e-3, rtol=2e-3), "case 2 mismatch"

    print("KERNEL_OK")
</pallas_src>

<mosaic_0001>
module attributes {stable_mosaic.version = 11 : i64} {
  func.func @_temporal_block_kernel(%arg0: i32, %arg1: memref<2x32x128xbf16, #tpu.memory_space<vmem>>, %arg2: memref<3x128x128xbf16, #tpu.memory_space<vmem>>, %arg3: memref<1x128xf32, #tpu.memory_space<vmem>>, %arg4: memref<3x128x128xbf16, #tpu.memory_space<vmem>>, %arg5: memref<1x128xf32, #tpu.memory_space<vmem>>, %arg6: memref<128x128xbf16, #tpu.memory_space<vmem>>, %arg7: memref<1x128xf32, #tpu.memory_space<vmem>>, %arg8: memref<2x16x128xf32, #tpu.memory_space<vmem>>, %arg9: memref<2x32x128xbf16, #tpu.memory_space<vmem>>) attributes {dimension_semantics = [#tpu.dimension_semantics<parallel>], iteration_bounds = array<i64: 1>, scalar_prefetch = 0 : i64, scratch_operands = 1 : i64, tpu.core_type = #tpu.core_type<tc>, window_params = [{transform_indices = @transform_0, window_bounds = array<i64: 2, 32, 128>}, {pipeline_mode = #tpu.pipeline_mode<synchronous>, transform_indices = @transform_1, window_bounds = array<i64: 3, 128, 128>}, {pipeline_mode = #tpu.pipeline_mode<synchronous>, transform_indices = @transform_2, window_bounds = array<i64: 1, 128>}, {pipeline_mode = #tpu.pipeline_mode<synchronous>, transform_indices = @transform_3, window_bounds = array<i64: 3, 128, 128>}, {pipeline_mode = #tpu.pipeline_mode<synchronous>, transform_indices = @transform_4, window_bounds = array<i64: 1, 128>}, {pipeline_mode = #tpu.pipeline_mode<synchronous>, transform_indices = @transform_5, window_bounds = array<i64: 128, 128>}, {pipeline_mode = #tpu.pipeline_mode<synchronous>, transform_indices = @transform_6, window_bounds = array<i64: 1, 128>}, {transform_indices = @transform_7, window_bounds = array<i64: 2, 16, 128>}]} {
    %cst = arith.constant 0.000000e+00 : f32
    %0 = vector.broadcast %cst : f32 to vector<32x128xf32>
    %c0 = arith.constant 0 : index
    %c12 = arith.constant 12 : index
    %c0_0 = arith.constant 0 : index
    %1 = vector.load %arg1[%c0, %c12, %c0_0] : memref<2x32x128xbf16, #tpu.memory_space<vmem>>, vector<2x16x128xbf16>
    %2 = vector.shape_cast %1 : vector<2x16x128xbf16> to vector<32x128xbf16>
    %c0_1 = arith.constant 0 : index
    %c0_2 = arith.constant 0 : index
    %c0_3 = arith.constant 0 : index
    %3 = vector.load %arg2[%c0_1, %c0_2, %c0_3] : memref<3x128x128xbf16, #tpu.memory_space<vmem>>, vector<1x128x128xbf16>
    %4 = vector.shape_cast %3 : vector<1x128x128xbf16> to vector<128x128xbf16>
    %cst_4 = arith.constant dense<0.000000e+00> : vector<32x128xf32>
    %5 = tpu.matmul %2, %4, %cst_4 {dimension_numbers = #tpu.dot_dimension_numbers<[1], [0], [0], [1], [0, 0, 1, 1], [], []>} : vector<32x128xbf16>, vector<128x128xbf16>, vector<32x128xf32> -> vector<32x128xf32>
    %6 = arith.addf %0, %5 : vector<32x128xf32>
    %c0_5 = arith.constant 0 : index
    %c14 = arith.constant 14 : index
    %c0_6 = arith.constant 0 : index
    %7 = vector.load %arg1[%c0_5, %c14, %c0_6] : memref<2x32x128xbf16, #tpu.memory_space<vmem>>, vector<2x16x128xbf16>
    %8 = vector.shape_cast %7 : vector<2x16x128xbf16> to vector<32x128xbf16>
    %c1 = arith.constant 1 : index
    %c0_7 = arith.constant 0 : index
    %c0_8 = arith.constant 0 : index
    %9 = vector.load %arg2[%c1, %c0_7, %c0_8] : memref<3x128x128xbf16, #tpu.memory_space<vmem>>, vector<1x128x128xbf16>
    %10 = vector.shape_cast %9 : vector<1x128x128xbf16> to vector<128x128xbf16>
    %cst_9 = arith.constant dense<0.000000e+00> : vector<32x128xf32>
    %11 = tpu.matmul %8, %10, %cst_9 {dimension_numbers = #tpu.dot_dimension_numbers<[1], [0], [0], [1], [0, 0, 1, 1], [], []>} : vector<32x128xbf16>, vector<128x128xbf16>, vector<32x128xf32> -> vector<32x128xf32>
    %12 = arith.addf %6, %11 : vector<32x128xf32>
    %c0_10 = arith.constant 0 : index
    %c16 = arith.constant 16 : index
    %c0_11 = arith.constant 0 : index
    %13 = vector.load %arg1[%c0_10, %c16, %c0_11] : memref<2x32x128xbf16, #tpu.memory_space<vmem>>, vector<2x16x128xbf16>
    %14 = vector.shape_cast %13 : vector<2x16x128xbf16> to vector<32x128xbf16>
    %c2 = arith.constant 2 : index
    %c0_12 = arith.constant 0 : index
    %c0_13 = arith.constant 0 : index
    %15 = vector.load %arg2[%c2, %c0_12, %c0_13] : memref<3x128x128xbf16, #tpu.memory_space<vmem>>, vector<1x128x128xbf16>
    %16 = vector.shape_cast %15 : vector<1x128x128xbf16> to vector<128x128xbf16>
    %cst_14 = arith.constant dense<0.000000e+00> : vector<32x128xf32>
    %17 = tpu.matmul %14, %16, %cst_14 {dimension_numbers = #tpu.dot_dimension_numbers<[1], [0], [0], [1], [0, 0, 1, 1], [], []>} : vector<32x128xbf16>, vector<128x128xbf16>, vector<32x128xf32> -> vector<32x128xf32>
    %18 = arith.addf %12, %17 : vector<32x128xf32>
    %c0_15 = arith.constant 0 : index
    %c0_16 = arith.constant 0 : index
    %19 = vector.load %arg3[%c0_15, %c0_16] : memref<1x128xf32, #tpu.memory_space<vmem>>, vector<1x128xf32>
    %20 = vector.broadcast %19 : vector<1x128xf32> to vector<32x128xf32>
    %21 = arith.addf %18, %20 : vector<32x128xf32>
    %cst_17 = arith.constant 0.000000e+00 : f32
    %22 = vector.broadcast %cst_17 : f32 to vector<32x128xf32>
    %23 = arith.maximumf %21, %22 : vector<32x128xf32>
    %cst_18 = arith.constant 0.000000e+00 : bf16
    %24 = vector.broadcast %cst_18 : bf16 to vector<2x16x128xbf16>
    %c0_19 = arith.constant 0 : index
    %c0_20 = arith.constant 0 : index
    %c0_21 = arith.constant 0 : index
    %25 = vector.load %arg9[%c0_19, %c0_20, %c0_21] : memref<2x32x128xbf16, #tpu.memory_space<vmem>>, vector<2x16x128xbf16>
    tpu.vector_store %arg9[%c0_19, %c0_20, %c0_21], %24 {strides = array<i32>} : memref<2x32x128xbf16, #tpu.memory_space<vmem>>, vector<2x16x128xbf16>,
    %26 = arith.truncf %23 : vector<32x128xf32> to vector<32x128xbf16>
    %27 = vector.shape_cast %26 : vector<32x128xbf16> to vector<2x16x128xbf16>
    %c0_22 = arith.constant 0 : index
    %c16_23 = arith.constant 16 : index
    %c0_24 = arith.constant 0 : index
    %28 = vector.load %arg9[%c0_22, %c16_23, %c0_24] : memref<2x32x128xbf16, #tpu.memory_space<vmem>>, vector<2x16x128xbf16>
    tpu.vector_store %arg9[%c0_22, %c16_23, %c0_24], %27 {strides = array<i32>} : memref<2x32x128xbf16, #tpu.memory_space<vmem>>, vector<2x16x128xbf16>,
    %cst_25 = arith.constant 0.000000e+00 : f32
    %29 = vector.broadcast %cst_25 : f32 to vector<32x128xf32>
    %c0_26 = arith.constant 0 : index
    %c12_27 = arith.constant 12 : index
    %c0_28 = arith.constant 0 : index
    %30 = vector.load %arg9[%c0_26, %c12_27, %c0_28] : memref<2x32x128xbf16, #tpu.memory_space<vmem>>, vector<2x16x128xbf16>
    %31 = vector.shape_cast %30 : vector<2x16x128xbf16> to vector<32x128xbf16>
    %c0_29 = arith.constant 0 : index
    %c0_30 = arith.constant 0 : index
    %c0_31 = arith.constant 0 : index
    %32 = vector.load %arg4[%c0_29, %c0_30, %c0_31] : memref<3x128x128xbf16, #tpu.memory_space<vmem>>, vector<1x128x128xbf16>
    %33 = vector.shape_cast %32 : vector<1x128x128xbf16> to vector<128x128xbf16>
    %cst_32 = arith.constant dense<0.000000e+00> : vector<32x128xf32>
    %34 = tpu.matmul %31, %33, %cst_32 {dimension_numbers = #tpu.dot_dimension_numbers<[1], [0], [0], [1], [0, 0, 1, 1], [], []>} : vector<32x128xbf16>, vector<128x128xbf16>, vector<32x128xf32> -> vector<32x128xf32>
    %35 = arith.addf %29, %34 : vector<32x128xf32>
    %c0_33 = arith.constant 0 : index
    %c14_34 = arith.constant 14 : index
    %c0_35 = arith.constant 0 : index
    %36 = vector.load %arg9[%c0_33, %c14_34, %c0_35] : memref<2x32x128xbf16, #tpu.memory_space<vmem>>, vector<2x16x128xbf16>
    %37 = vector.shape_cast %36 : vector<2x16x128xbf16> to vector<32x128xbf16>
    %c1_36 = arith.constant 1 : index
    %c0_37 = arith.constant 0 : index
    %c0_38 = arith.constant 0 : index
    %38 = vector.load %arg4[%c1_36, %c0_37, %c0_38] : memref<3x128x128xbf16, #tpu.memory_space<vmem>>, vector<1x128x128xbf16>
    %39 = vector.shape_cast %38 : vector<1x128x128xbf16> to vector<128x128xbf16>
    %cst_39 = arith.constant dense<0.000000e+00> : vector<32x128xf32>
    %40 = tpu.matmul %37, %39, %cst_39 {dimension_numbers = #tpu.dot_dimension_numbers<[1], [0], [0], [1], [0, 0, 1, 1], [], []>} : vector<32x128xbf16>, vector<128x128xbf16>, vector<32x128xf32> -> vector<32x128xf32>
    %41 = arith.addf %35, %40 : vector<32x128xf32>
    %c0_40 = arith.constant 0 : index
    %c16_41 = arith.constant 16 : index
    %c0_42 = arith.constant 0 : index
    %42 = vector.load %arg9[%c0_40, %c16_41, %c0_42] : memref<2x32x128xbf16, #tpu.memory_space<vmem>>, vector<2x16x128xbf16>
    %43 = vector.shape_cast %42 : vector<2x16x128xbf16> to vector<32x128xbf16>
    %c2_43 = arith.constant 2 : index
    %c0_44 = arith.constant 0 : index
    %c0_45 = arith.constant 0 : index
    %44 = vector.load %arg4[%c2_43, %c0_44, %c0_45] : memref<3x128x128xbf16, #tpu.memory_space<vmem>>, vector<1x128x128xbf16>
    %45 = vector.shape_cast %44 : vector<1x128x128xbf16> to vector<128x128xbf16>
    %cst_46 = arith.constant dense<0.000000e+00> : vector<32x128xf32>
    %46 = tpu.matmul %43, %45, %cst_46 {dimension_numbers = #tpu.dot_dimension_numbers<[1], [0], [0], [1], [0, 0, 1, 1], [], []>} : vector<32x128xbf16>, vector<128x128xbf16>, vector<32x128xf32> -> vector<32x128xf32>
    %47 = arith.addf %41, %46 : vector<32x128xf32>
    %c0_47 = arith.constant 0 : index
    %c0_48 = arith.constant 0 : index
    %48 = vector.load %arg5[%c0_47, %c0_48] : memref<1x128xf32, #tpu.memory_space<vmem>>, vector<1x128xf32>
    %49 = vector.broadcast %48 : vector<1x128xf32> to vector<32x128xf32>
    %50 = arith.addf %47, %49 : vector<32x128xf32>
    %cst_49 = arith.constant 0.000000e+00 : f32
    %51 = vector.broadcast %cst_49 : f32 to vector<32x128xf32>
    %52 = arith.maximumf %50, %51 : vector<32x128xf32>
    %c0_50 = arith.constant 0 : index
    %c16_51 = arith.constant 16 : index
    %c0_52 = arith.constant 0 : index
    %53 = vector.load %arg1[%c0_50, %c16_51, %c0_52] : memref<2x32x128xbf16, #tpu.memory_space<vmem>>, vector<2x16x128xbf16>
    %54 = vector.shape_cast %53 : vector<2x16x128xbf16> to vector<32x128xbf16>
    %c0_53 = arith.constant 0 : index
    %c0_54 = arith.constant 0 : index
    %55 = vector.load %arg6[%c0_53, %c0_54] : memref<128x128xbf16, #tpu.memory_space<vmem>>, vector<128x128xbf16>
    %cst_55 = arith.constant dense<0.000000e+00> : vector<32x128xf32>
    %56 = tpu.matmul %54, %55, %cst_55 {dimension_numbers = #tpu.dot_dimension_numbers<[1], [0], [0], [1], [0, 0, 1, 1], [], []>} : vector<32x128xbf16>, vector<128x128xbf16>, vector<32x128xf32> -> vector<32x128xf32>
    %c0_56 = arith.constant 0 : index
    %c0_57 = arith.constant 0 : index
    %57 = vector.load %arg7[%c0_56, %c0_57] : memref<1x128xf32, #tpu.memory_space<vmem>>, vector<1x128xf32>
    %58 = vector.broadcast %57 : vector<1x128xf32> to vector<32x128xf32>
    %59 = arith.addf %56, %58 : vector<32x128xf32>
    %60 = arith.addf %52, %59 : vector<32x128xf32>
    %cst_58 = arith.constant 0.000000e+00 : f32
    %61 = vector.broadcast %cst_58 : f32 to vector<32x128xf32>
    %62 = arith.maximumf %60, %61 : vector<32x128xf32>
    %63 = vector.shape_cast %62 : vector<32x128xf32> to vector<2x16x128xf32>
    %c0_59 = arith.constant 0 : index
    %c0_60 = arith.constant 0 : index
    %c0_61 = arith.constant 0 : index
    %64 = vector.load %arg8[%c0_59, %c0_60, %c0_61] : memref<2x16x128xf32, #tpu.memory_space<vmem>>, vector<2x16x128xf32>
    tpu.vector_store %arg8[%c0_59, %c0_60, %c0_61], %63 {strides = array<i32>} : memref<2x16x128xf32, #tpu.memory_space<vmem>>, vector<2x16x128xf32>,
    return
  }
  func.func @transform_0(%arg0: i32) -> (i32, i32, i32) {
    %c0_i32 = arith.constant 0 : i32
    %c0_i32_0 = arith.constant 0 : i32
    %c0_i32_1 = arith.constant 0 : i32
    return %arg0, %c0_i32, %c0_i32_0 : i32, i32, i32
  }
  func.func @transform_1(%arg0: i32) -> (i32, i32, i32) {
    %c0_i32 = arith.constant 0 : i32
    %c0_i32_0 = arith.constant 0 : i32
    %c0_i32_1 = arith.constant 0 : i32
    %c0_i32_2 = arith.constant 0 : i32
    return %c0_i32, %c0_i32_0, %c0_i32_1 : i32, i32, i32
  }
  func.func @transform_2(%arg0: i32) -> (i32, i32) {
    %c0_i32 = arith.constant 0 : i32
    %c0_i32_0 = arith.constant 0 : i32
    %c0_i32_1 = arith.constant 0 : i32
    return %c0_i32, %c0_i32_0 : i32, i32
  }
  func.func @transform_3(%arg0: i32) -> (i32, i32, i32) {
    %c0_i32 = arith.constant 0 : i32
    %c0_i32_0 = arith.constant 0 : i32
    %c0_i32_1 = arith.constant 0 : i32
    %c0_i32_2 = arith.constant 0 : i32
    return %c0_i32, %c0_i32_0, %c0_i32_1 : i32, i32, i32
  }
  func.func @transform_4(%arg0: i32) -> (i32, i32) {
    %c0_i32 = arith.constant 0 : i32
    %c0_i32_0 = arith.constant 0 : i32
    %c0_i32_1 = arith.constant 0 : i32
    return %c0_i32, %c0_i32_0 : i32, i32
  }
  func.func @transform_5(%arg0: i32) -> (i32, i32) {
    %c0_i32 = arith.constant 0 : i32
    %c0_i32_0 = arith.constant 0 : i32
    %c0_i32_1 = arith.constant 0 : i32
    return %c0_i32, %c0_i32_0 : i32, i32
  }
  func.func @transform_6(%arg0: i32) -> (i32, i32) {
    %c0_i32 = arith.constant 0 : i32
    %c0_i32_0 = arith.constant 0 : i32
    %c0_i32_1 = arith.constant 0 : i32
    return %c0_i32, %c0_i32_0 : i32, i32
  }
  func.func @transform_7(%arg0: i32) -> (i32, i32, i32) {
    %c0_i32 = arith.constant 0 : i32
    %c0_i32_0 = arith.constant 0 : i32
    %c0_i32_1 = arith.constant 0 : i32
    return %arg0, %c0_i32, %c0_i32_0 : i32, i32, i32
  }
}

</mosaic_0001>

<llo_original>
// kernel: tpu_custom_call.1
$region0: #{tpu_custom_call.1}
  #allocation0 [shape = 'u32[]', space=smem, size = 0x4, offset = 0x4, fixed_abs, tag = 'smem constant byte address 0x4 - core index']
  #allocation1 [shape = 'u32[144,128]{1,0:T(1,128)}', space=vmem, size = 0x12000, scoped, tag = 'internal scratch']
  #allocation2 [shape = 'bf16[2,32,128]{2,1,0:T(8,128)(2,1)}', space=vmem, size = 0x4000, scoped, tag = 'scratch operand']
  %s0 = inlined_call_operand.hbm [shape: bf16[2,32,128], index: 0, kind: input, shape index: {}]
  %s1 = inlined_call_operand.hbm [shape: bf16[3,128,128], index: 1, kind: input, shape index: {}]
  %s2 = inlined_call_operand.vmem [shape: f32[1,128], index: 2, kind: input, shape index: {}]
  %s3 = inlined_call_operand.hbm [shape: bf16[3,128,128], index: 3, kind: input, shape index: {}]
  %s4 = inlined_call_operand.vmem [shape: f32[1,128], index: 4, kind: input, shape index: {}]
  %s5 = inlined_call_operand.hbm [shape: bf16[128,128], index: 5, kind: input, shape index: {}]
  %s6 = inlined_call_operand.vmem [shape: f32[1,128], index: 6, kind: input, shape index: {}]
  %s7 = inlined_call_operand.hbm [shape: f32[2,16,128], index: 7, kind: output, shape index: {}]
  %s8 = sld [smem:[#allocation0]]
  $region54: #{tpu_custom_call.1} parent=0
    _
  %s10 = ssub.s32 1, %s8
  %s11 = scalar_select 0, %s10, %s8
  $region1: #{tpu_custom_call.1} parent=0
    #allocation3 [shape = 'u8[16384]{0}', space=vmem, size = 0x4000, scoped, tag = 'input window, operand 0, single buffered']
    #allocation4 [shape = 's32[1]{0}', space=sflag, size = 0x4, scoped, tag = 'scoped memory for tpu_custom_call.1']
    #allocation5 [shape = 's32[1]{0}', space=sflag, size = 0x4, scoped, tag = 'scoped memory for tpu_custom_call.1']
    #allocation6 [shape = 'u8[98304]{0}', space=vmem, size = 0x18000, scoped, tag = 'input window, operand 1, single buffered']
    #allocation7 [shape = 's32[1]{0}', space=sflag, size = 0x4, scoped, tag = 'scoped memory for tpu_custom_call.1']
    #allocation8 [shape = 'u8[98304]{0}', space=vmem, size = 0x18000, scoped, tag = 'input window, operand 3, single buffered']
    #allocation9 [shape = 'u8[32768]{0}', space=vmem, size = 0x8000, scoped, tag = 'input window, operand 5, single buffered']
    #allocation10 [shape = 's32[1]{0}', space=sflag, size = 0x4, scoped, tag = 'scoped memory for tpu_custom_call.1']
    #allocation11 [shape = 'u8[16384]{0}', space=vmem, size = 0x4000, scoped, tag = 'output window, operand 0, single buffered']
    %12 = vsyncpa [#allocation4], 0
    %13 = vsyncpa [#allocation7], 0
    %14 = vsyncpa [#allocation10], 0
    %15 = vsyncpa [#allocation5], 0
    // Predicated region
    $region2: #{tpu_custom_call.1} parent=1 // pred_check
      _
    $region3: #{tpu_custom_call.1} parent=1 // pred_check_branch
      %17 = sbr.rel (0) target = $region5
    $region4: #{tpu_custom_call.1} parent=1 // pred_region
      %s19 = ssub.s32 512, 512
      %20 = vsyncadd [#allocation4], %s19
      %s21 = sshll.u32 [#allocation3], 4
      %s22 = int_to_ptr.vmem [resolvable:$true] %s21
      %27 = dma.hbm_to_vmem [thread:$0]  %s0, 512, %s22, [#allocation4], 64, 64, 4
    $region5: #{tpu_custom_call.1} parent=1 // pred_fallthru
      _
    // Predicated region
    $region6: #{tpu_custom_call.1} parent=1 // pred_check
      _
    $region7: #{tpu_custom_call.1} parent=1 // pred_check_branch
      %29 = sbr.rel (0) target = $region9
    $region8: #{tpu_custom_call.1} parent=1 // pred_region
      %s31 = ssub.s32 3072, 3072
      %32 = vsyncadd [#allocation7], %s31
      %s33 = sshll.u32 [#allocation6], 4
      %s34 = int_to_ptr.vmem [resolvable:$true] %s33
      %39 = dma.hbm_to_vmem [thread:$0]  %s1, 3072, %s34, [#allocation7], 64, 64, 4
    $region9: #{tpu_custom_call.1} parent=1 // pred_fallthru
      _
    // Predicated region
    $region10: #{tpu_custom_call.1} parent=1 // pred_check
      _
    $region11: #{tpu_custom_call.1} parent=1 // pred_check_branch
      %41 = sbr.rel (0) target = $region13
    $region12: #{tpu_custom_call.1} parent=1 // pred_region
      _
    $region13: #{tpu_custom_call.1} parent=1 // pred_fallthru
      _
    // Predicated region
    $region14: #{tpu_custom_call.1} parent=1 // pred_check
      _
    $region15: #{tpu_custom_call.1} parent=1 // pred_check_branch
      %43 = sbr.rel (0) target = $region17
    $region16: #{tpu_custom_call.1} parent=1 // pred_region
      %s45 = ssub.s32 3072, 3072
      %46 = vsyncadd [#allocation7], %s45
      %s47 = sshll.u32 [#allocation8], 4
      %s48 = int_to_ptr.vmem [resolvable:$true] %s47
      %53 = dma.hbm_to_vmem [thread:$0]  %s3, 3072, %s48, [#allocation7], 64, 64, 4
    $region17: #{tpu_custom_call.1} parent=1 // pred_fallthru
      _
    // Predicated region
    $region18: #{tpu_custom_call.1} parent=1 // pred_check
      _
    $region19: #{tpu_custom_call.1} parent=1 // pred_check_branch
      %55 = sbr.rel (0) target = $region21
    $region20: #{tpu_custom_call.1} parent=1 // pred_region
      _
    $region21: #{tpu_custom_call.1} parent=1 // pred_fallthru
      _
    // Predicated region
    $region22: #{tpu_custom_call.1} parent=1 // pred_check
      _
    $region23: #{tpu_custom_call.1} parent=1 // pred_check_branch
      %57 = sbr.rel (0) target = $region25
    $region24: #{tpu_custom_call.1} parent=1 // pred_region
      %s59 = ssub.s32 1024, 1024
      %60 = vsyncadd [#allocation10], %s59
      %s61 = sshll.u32 [#allocation9], 4
      %s62 = int_to_ptr.vmem [resolvable:$true] %s61
      %67 = dma.hbm_to_vmem [thread:$0]  %s5, 1024, %s62, [#allocation10], 64, 64, 4
    $region25: #{tpu_custom_call.1} parent=1 // pred_fallthru
      _
    // Predicated region
    $region26: #{tpu_custom_call.1} parent=1 // pred_check
      _
    $region27: #{tpu_custom_call.1} parent=1 // pred_check_branch
      %69 = sbr.rel (0) target = $region29
    $region28: #{tpu_custom_call.1} parent=1 // pred_region
      _
    $region29: #{tpu_custom_call.1} parent=1 // pred_fallthru
      _
    // Predicated region
    $region30: #{tpu_custom_call.1} parent=1 // pred_check
      _
    $region31: #{tpu_custom_call.1} parent=1 // pred_check_branch
      %71 = sbr.rel (0) target = $region33
    $region32: #{tpu_custom_call.1} parent=1 // pred_region
      %72 = dma.done [#allocation4], 512
    $region33: #{tpu_custom_call.1} parent=1 // pred_fallthru
      _
    // Predicated region
    $region34: #{tpu_custom_call.1} parent=1 // pred_check
      _
    $region35: #{tpu_custom_call.1} parent=1 // pred_check_branch
      %74 = sbr.rel (0) target = $region37
    $region36: #{tpu_custom_call.1} parent=1 // pred_region
      %75 = dma.done [#allocation7], 3072
    $region37: #{tpu_custom_call.1} parent=1 // pred_fallthru
      _
    // Predicated region
    $region38: #{tpu_custom_call.1} parent=1 // pred_check
      _
    $region39: #{tpu_custom_call.1} parent=1 // pred_check_branch
      %77 = sbr.rel (0) target = $region41
    $region40: #{tpu_custom_call.1} parent=1 // pred_region
      %78 = dma.done [#allocation7], 3072
    $region41: #{tpu_custom_call.1} parent=1 // pred_fallthru
      _
    // Predicated region
    $region42: #{tpu_custom_call.1} parent=1 // pred_check
      _
    $region43: #{tpu_custom_call.1} parent=1 // pred_check_branch
      %80 = sbr.rel (0) target = $region45
    $region44: #{tpu_custom_call.1} parent=1 // pred_region
      %81 = dma.done [#allocation10], 1024
    $region45: #{tpu_custom_call.1} parent=1 // pred_fallthru
      _
    %v83 = vld [vmem:[#allocation3 + $0x4] sm:$0xc]
    %v84 = vld [vmem:[#allocation3 + $0x8] sm:$0xf]
    %v85 = vld [vmem:[#allocation3 + $0xc] sm:$0x3]
    %v86 = vld [vmem:[#allocation3 + $0x14] sm:$0xc]
    %v87 = vld [vmem:[#allocation3 + $0x18] sm:$0xf]
    %v88 = vld [vmem:[#allocation3 + $0x1c] sm:$0x3]
    %vm95 = vcmask 1041408
    %vm96 = vcmask 1045508
    %vm97 = vmor %vm95, %vm96
    %v98 = vrot.slane %v83, 6
    %v99 = vrot.slane %v98, 4
    %v100 = vrot.slane %v84, 6
    %v101 = vsel %vm97, %v99, %v100
    %v102 = vrot.slane %v100, 4
    %v103 = vrot.slane %v85, 6
    %v104 = vsel %vm97, %v102, %v103
    %v105 = vrot.slane %v86, 6
    %v106 = vrot.slane %v105, 4
    %v107 = vrot.slane %v87, 6
    %v108 = vsel %vm97, %v106, %v107
    %v109 = vrot.slane %v107, 4
    %v110 = vrot.slane %v88, 6
    %v111 = vsel %vm97, %v109, %v110
    %v112 = vld [vmem:[#allocation6] sm:$0xf]
    %v113 = vld [vmem:[#allocation6 + $0x4] sm:$0xf]
    %v114 = vld [vmem:[#allocation6 + $0x8] sm:$0xf]
    %v115 = vld [vmem:[#allocation6 + $0xc] sm:$0xf]
    %v116 = vld [vmem:[#allocation6 + $0x10] sm:$0xf]
    %v117 = vld [vmem:[#allocation6 + $0x14] sm:$0xf]
    %v118 = vld [vmem:[#allocation6 + $0x18] sm:$0xf]
    %v119 = vld [vmem:[#allocation6 + $0x1c] sm:$0xf]
    %v120 = vld [vmem:[#allocation6 + $0x20] sm:$0xf]
    %v121 = vld [vmem:[#allocation6 + $0x24] sm:$0xf]
    %v122 = vld [vmem:[#allocation6 + $0x28] sm:$0xf]
    %v123 = vld [vmem:[#allocation6 + $0x2c] sm:$0xf]
    %v124 = vld [vmem:[#allocation6 + $0x30] sm:$0xf]
    %v125 = vld [vmem:[#allocation6 + $0x34] sm:$0xf]
    %v126 = vld [vmem:[#allocation6 + $0x38] sm:$0xf]
    %v127 = vld [vmem:[#allocation6 + $0x3c] sm:$0xf]
    %v128 = vld [vmem:[#allocation3 + $0x4] sm:$0x8]
    %v129 = vld [vmem:[#allocation3 + $0xc] sm:$0x7]
    %v130 = vld [vmem:[#allocation3 + $0x14] sm:$0x8]
    %v131 = vld [vmem:[#allocation3 + $0x1c] sm:$0x7]
    %vm136 = vcmask 1040384
    %vm137 = vcmask 1044484
    %vm138 = vmor %vm136, %vm137
    %v139 = vrot.slane %v128, 7
    %v140 = vrot.slane %v139, 4
    %v141 = vrot.slane %v84, 7
    %v142 = vsel %vm138, %v140, %v141
    %v143 = vrot.slane %v141, 4
    %v144 = vrot.slane %v129, 7
    %v145 = vsel %vm138, %v143, %v144
    %v146 = vrot.slane %v130, 7
    %v147 = vrot.slane %v146, 4
    %v148 = vrot.slane %v87, 7
    %v149 = vsel %vm138, %v147, %v148
    %v150 = vrot.slane %v148, 4
    %v151 = vrot.slane %v131, 7
    %v152 = vsel %vm138, %v150, %v151
    %s153 = scalar_lea.vmem [#allocation6], 64
    %v154 = vld [vmem:[%s153] sm:$0xf]
    %v155 = vld [vmem:[%s153 + $0x4] sm:$0xf]
    %v156 = vld [vmem:[%s153 + $0x8] sm:$0xf]
    %v157 = vld [vmem:[%s153 + $0xc] sm:$0xf]
    %v158 = vld [vmem:[%s153 + $0x10] sm:$0xf]
    %v159 = vld [vmem:[%s153 + $0x14] sm:$0xf]
    %v160 = vld [vmem:[%s153 + $0x18] sm:$0xf]
    %v161 = vld [vmem:[%s153 + $0x1c] sm:$0xf]
    %v162 = vld [vmem:[%s153 + $0x20] sm:$0xf]
    %v163 = vld [vmem:[%s153 + $0x24] sm:$0xf]
    %v164 = vld [vmem:[%s153 + $0x28] sm:$0xf]
    %v165 = vld [vmem:[%s153 + $0x2c] sm:$0xf]
    %v166 = vld [vmem:[%s153 + $0x30] sm:$0xf]
    %v167 = vld [vmem:[%s153 + $0x34] sm:$0xf]
    %v168 = vld [vmem:[%s153 + $0x38] sm:$0xf]
    %v169 = vld [vmem:[%s153 + $0x3c] sm:$0xf]
    %v170 = vunpack.c.l.b16 %v142
    %v171 = vunpack.c.l.b16 %v145
    %v172 = vunpack.c.l.b16 %v149
    %v173 = vunpack.c.l.b16 %v152
    %v174 = vpack.c.b16 %v171, %v170
    %v175 = vpack.c.b16 %v173, %v172
    %v194 = vunpack.c.l.b16 %v154
    %v195 = vunpack.c.l.b16 %v155
    %v196 = vunpack.c.l.b16 %v156
    %v197 = vunpack.c.l.b16 %v157
    %v198 = vunpack.c.l.b16 %v158
    %v199 = vunpack.c.l.b16 %v159
    %v200 = vunpack.c.l.b16 %v160
    %v201 = vunpack.c.l.b16 %v161
    %v202 = vunpack.c.l.b16 %v162
    %v203 = vunpack.c.l.b16 %v163
    %v204 = vunpack.c.l.b16 %v164
    %v205 = vunpack.c.l.b16 %v165
    %v206 = vunpack.c.l.b16 %v166
    %v207 = vunpack.c.l.b16 %v167
    %v208 = vunpack.c.l.b16 %v168
    %v209 = vunpack.c.l.b16 %v169
    %v210 = vpack.c.b16 %v195, %v194
    %v211 = vpack.c.b16 %v197, %v196
    %v212 = vpack.c.b16 %v199, %v198
    %v213 = vpack.c.b16 %v201, %v200
    %v214 = vpack.c.b16 %v203, %v202
    %v215 = vpack.c.b16 %v205, %v204
    %v216 = vpack.c.b16 %v207, %v206
    %v217 = vpack.c.b16 %v209, %v208
    %226 = vmatprep.subr.bf16.mxu0 0
    %227 = vmatpush1.bf16.msra.mxu0 %v217
    %228 = vmatprep.subr.bf16.mxu0 0
    %229 = vmatpush1.bf16.msra.mxu0 %v216
    %230 = vmatprep.subr.bf16.mxu0 0
    %231 = vmatpush1.bf16.msra.mxu0 %v215
    %232 = vmatprep.subr.bf16.mxu0 0
    %233 = vmatpush1.bf16.msra.mxu0 %v214
    %234 = vmatprep.subr.bf16.mxu0 0
    %235 = vmatpush1.bf16.msra.mxu0 %v213
    %236 = vmatprep.subr.bf16.mxu0 0
    %237 = vmatpush1.bf16.msra.mxu0 %v212
    %238 = vmatprep.subr.bf16.mxu0 0
    %239 = vmatpush1.bf16.msra.mxu0 %v211
    %240 = vmatprep.subr.bf16.mxu0 0
    %241 = vmatpush1.bf16.msra.mxu0 %v210
    %242 = vmatprep.subr.bf16.mxu0 0
    %243 = vmatpush2.bf16.msra.mxu0 0
    %244 = vmatprep.subr.bf16.mxu0 0
    %245 = vmatpush2.bf16.msra.mxu0 0
    %246 = vmatprep.subr.bf16.mxu0 0
    %247 = vmatpush2.bf16.msra.mxu0 0
    %248 = vmatprep.subr.bf16.mxu0 0
    %249 = vmatpush2.bf16.msra.mxu0 0
    %250 = vmatprep.subr.bf16.mxu0 0
    %251 = vmatpush2.bf16.msra.mxu0 0
    %252 = vmatprep.subr.bf16.mxu0 0
    %253 = vmatpush2.bf16.msra.mxu0 0
    %254 = vmatprep.subr.bf16.mxu0 0
    %255 = vmatpush2.bf16.msra.mxu0 0
    %256 = vmatprep.subr.bf16.mxu0 0
    %257 = vmatpush2.bf16.msra.mxu0 0
    %258 = vmatprep.mubr.bf16.mxu0 0
    %259 = vmatmul.mubr.bf16.gmra.mxu0 %v174
    %v260 = vpop.f32.mrf.mxu0
    %v261 = vadd.f32 0.0, %v260
    %v262 = vpop.f32.mrf.mxu0
    %v263 = vpop.f32.mrf.mxu0
    %v264 = vadd.f32 0.0, %v263
    %v265 = vpop.f32.mrf.mxu0
    %266 = vmatprep.mubr.bf16.mxu0 0
    %267 = vmatmul.mubr.bf16.gmra.mxu0 %v175
    %v268 = vpop.f32.mrf.mxu0
    %v269 = vadd.f32 0.0, %v268
    %v270 = vpop.f32.mrf.mxu0
    %v271 = vpop.f32.mrf.mxu0
    %v272 = vadd.f32 0.0, %v271
    %v273 = vpop.f32.mrf.mxu0
    %274 = vdwg.mxu0
    %v275 = vunpack.c.l.b16 %v101
    %v276 = vunpack.c.l.b16 %v104
    %v277 = vunpack.c.l.b16 %v108
    %v278 = vunpack.c.l.b16 %v111
    %v279 = vpack.c.b16 %v276, %v275
    %v280 = vpack.c.b16 %v278, %v277
    %v299 = vunpack.c.l.b16 %v112
    %v300 = vunpack.c.l.b16 %v113
    %v301 = vunpack.c.l.b16 %v114
    %v302 = vunpack.c.l.b16 %v115
    %v303 = vunpack.c.l.b16 %v116
    %v304 = vunpack.c.l.b16 %v117
    %v305 = vunpack.c.l.b16 %v118
    %v306 = vunpack.c.l.b16 %v119
    %v307 = vunpack.c.l.b16 %v120
    %v308 = vunpack.c.l.b16 %v121
    %v309 = vunpack.c.l.b16 %v122
    %v310 = vunpack.c.l.b16 %v123
    %v311 = vunpack.c.l.b16 %v124
    %v312 = vunpack.c.l.b16 %v125
    %v313 = vunpack.c.l.b16 %v126
    %v314 = vunpack.c.l.b16 %v127
    %v315 = vpack.c.b16 %v300, %v299
    %v316 = vpack.c.b16 %v302, %v301
    %v317 = vpack.c.b16 %v304, %v303
    %v318 = vpack.c.b16 %v306, %v305
    %v319 = vpack.c.b16 %v308, %v307
    %v320 = vpack.c.b16 %v310, %v309
    %v321 = vpack.c.b16 %v312, %v311
    %v322 = vpack.c.b16 %v314, %v313
    %331 = vmatprep.subr.bf16.mxu0 0
    %332 = vmatpush1.bf16.msra.mxu0 %v322
    %333 = vmatprep.subr.bf16.mxu0 0
    %334 = vmatpush1.bf16.msra.mxu0 %v321
    %335 = vmatprep.subr.bf16.mxu0 0
    %336 = vmatpush1.bf16.msra.mxu0 %v320
    %337 = vmatprep.subr.bf16.mxu0 0
    %338 = vmatpush1.bf16.msra.mxu0 %v319
    %339 = vmatprep.subr.bf16.mxu0 0
    %340 = vmatpush1.bf16.msra.mxu0 %v318
    %341 = vmatprep.subr.bf16.mxu0 0
    %342 = vmatpush1.bf16.msra.mxu0 %v317
    %343 = vmatprep.subr.bf16.mxu0 0
    %344 = vmatpush1.bf16.msra.mxu0 %v316
    %345 = vmatprep.subr.bf16.mxu0 0
    %346 = vmatpush1.bf16.msra.mxu0 %v315
    %347 = vmatprep.subr.bf16.mxu0 0
    %348 = vmatpush2.bf16.msra.mxu0 0
    %349 = vmatprep.subr.bf16.mxu0 0
    %350 = vmatpush2.bf16.msra.mxu0 0
    %351 = vmatprep.subr.bf16.mxu0 0
    %352 = vmatpush2.bf16.msra.mxu0 0
    %353 = vmatprep.subr.bf16.mxu0 0
    %354 = vmatpush2.bf16.msra.mxu0 0
    %355 = vmatprep.subr.bf16.mxu0 0
    %356 = vmatpush2.bf16.msra.mxu0 0
    %357 = vmatprep.subr.bf16.mxu0 0
    %358 = vmatpush2.bf16.msra.mxu0 0
    %359 = vmatprep.subr.bf16.mxu0 0
    %360 = vmatpush2.bf16.msra.mxu0 0
    %361 = vmatprep.subr.bf16.mxu0 0
    %362 = vmatpush2.bf16.msra.mxu0 0
    %363 = vmatprep.mubr.bf16.mxu0 0
    %364 = vmatmul.mubr.bf16.gmra.mxu0 %v279
    %v365 = vpop.f32.mrf.mxu0
    %v366 = vadd.f32 %v261, %v365
    %v367 = vpop.f32.mrf.mxu0
    %v368 = vpop.f32.mrf.mxu0
    %v369 = vadd.f32 %v264, %v368
    %v370 = vpop.f32.mrf.mxu0
    %371 = vmatprep.mubr.bf16.mxu0 0
    %372 = vmatmul.mubr.bf16.gmra.mxu0 %v280
    %v373 = vpop.f32.mrf.mxu0
    %v374 = vadd.f32 %v269, %v373
    %v375 = vpop.f32.mrf.mxu0
    %v376 = vpop.f32.mrf.mxu0
    %v377 = vadd.f32 %v272, %v376
    %v378 = vpop.f32.mrf.mxu0
    %379 = vdwg.mxu0
    %v380 = vld [vmem:[#allocation3 + $0xc] sm:$0xf]
    %v381 = vld [vmem:[#allocation3 + $0x1c] sm:$0xf]
    %s382 = scalar_lea.vmem [#allocation6], 128
    %v383 = vld [vmem:[%s382] sm:$0xf]
    %v384 = vld [vmem:[%s382 + $0x4] sm:$0xf]
    %v385 = vld [vmem:[%s382 + $0x8] sm:$0xf]
    %v386 = vld [vmem:[%s382 + $0xc] sm:$0xf]
    %v387 = vld [vmem:[%s382 + $0x10] sm:$0xf]
    %v388 = vld [vmem:[%s382 + $0x14] sm:$0xf]
    %v389 = vld [vmem:[%s382 + $0x18] sm:$0xf]
    %v390 = vld [vmem:[%s382 + $0x1c] sm:$0xf]
    %v391 = vld [vmem:[%s382 + $0x20] sm:$0xf]
    %v392 = vld [vmem:[%s382 + $0x24] sm:$0xf]
    %v393 = vld [vmem:[%s382 + $0x28] sm:$0xf]
    %v394 = vld [vmem:[%s382 + $0x2c] sm:$0xf]
    %v395 = vld [vmem:[%s382 + $0x30] sm:$0xf]
    %v396 = vld [vmem:[%s382 + $0x34] sm:$0xf]
    %v397 = vld [vmem:[%s382 + $0x38] sm:$0xf]
    %v398 = vld [vmem:[%s382 + $0x3c] sm:$0xf]
    %v401 = vunpack.c.l.b16 %v84
    %v402 = vunpack.c.l.b16 %v380
    %v403 = vunpack.c.l.b16 %v87
    %v404 = vunpack.c.l.b16 %v381
    %v405 = vpack.c.b16 %v402, %v401
    %v406 = vpack.c.b16 %v404, %v403
    %v425 = vunpack.c.l.b16 %v383
    %v426 = vunpack.c.l.b16 %v384
    %v427 = vunpack.c.l.b16 %v385
    %v428 = vunpack.c.l.b16 %v386
    %v429 = vunpack.c.l.b16 %v387
    %v430 = vunpack.c.l.b16 %v388
    %v431 = vunpack.c.l.b16 %v389
    %v432 = vunpack.c.l.b16 %v390
    %v433 = vunpack.c.l.b16 %v391
    %v434 = vunpack.c.l.b16 %v392
    %v435 = vunpack.c.l.b16 %v393
    %v436 = vunpack.c.l.b16 %v394
    %v437 = vunpack.c.l.b16 %v395
    %v438 = vunpack.c.l.b16 %v396
    %v439 = vunpack.c.l.b16 %v397
    %v440 = vunpack.c.l.b16 %v398
    %v441 = vpack.c.b16 %v426, %v425
    %v442 = vpack.c.b16 %v428, %v427
    %v443 = vpack.c.b16 %v430, %v429
    %v444 = vpack.c.b16 %v432, %v431
    %v445 = vpack.c.b16 %v434, %v433
    %v446 = vpack.c.b16 %v436, %v435
    %v447 = vpack.c.b16 %v438, %v437
    %v448 = vpack.c.b16 %v440, %v439
    %457 = vmatprep.subr.bf16.mxu0 0
    %458 = vmatpush1.bf16.msra.mxu0 %v448
    %459 = vmatprep.subr.bf16.mxu0 0
    %460 = vmatpush1.bf16.msra.mxu0 %v447
    %461 = vmatprep.subr.bf16.mxu0 0
    %462 = vmatpush1.bf16.msra.mxu0 %v446
    %463 = vmatprep.subr.bf16.mxu0 0
    %464 = vmatpush1.bf16.msra.mxu0 %v445
    %465 = vmatprep.subr.bf16.mxu0 0
    %466 = vmatpush1.bf16.msra.mxu0 %v444
    %467 = vmatprep.subr.bf16.mxu0 0
    %468 = vmatpush1.bf16.msra.mxu0 %v443
    %469 = vmatprep.subr.bf16.mxu0 0
    %470 = vmatpush1.bf16.msra.mxu0 %v442
    %471 = vmatprep.subr.bf16.mxu0 0
    %472 = vmatpush1.bf16.msra.mxu0 %v441
    %473 = vmatprep.subr.bf16.mxu0 0
    %474 = vmatpush2.bf16.msra.mxu0 0
    %475 = vmatprep.subr.bf16.mxu0 0
    %476 = vmatpush2.bf16.msra.mxu0 0
    %477 = vmatprep.subr.bf16.mxu0 0
    %478 = vmatpush2.bf16.msra.mxu0 0
    %479 = vmatprep.subr.bf16.mxu0 0
    %480 = vmatpush2.bf16.msra.mxu0 0
    %481 = vmatprep.subr.bf16.mxu0 0
    %482 = vmatpush2.bf16.msra.mxu0 0
    %483 = vmatprep.subr.bf16.mxu0 0
    %484 = vmatpush2.bf16.msra.mxu0 0
    %485 = vmatprep.subr.bf16.mxu0 0
    %486 = vmatpush2.bf16.msra.mxu0 0
    %487 = vmatprep.subr.bf16.mxu0 0
    %488 = vmatpush2.bf16.msra.mxu0 0
    %489 = vmatprep.mubr.bf16.mxu0 0
    %490 = vmatmul.mubr.bf16.gmra.mxu0 %v405
    %v491 = vpop.f32.mrf.mxu0
    %v492 = vadd.f32 0.0, %v491
    %v493 = vpop.f32.mrf.mxu0
    %v494 = vpop.f32.mrf.mxu0
    %v495 = vadd.f32 0.0, %v494
    %v496 = vpop.f32.mrf.mxu0
    %497 = vmatprep.mubr.bf16.mxu0 0
    %498 = vmatmul.mubr.bf16.gmra.mxu0 %v406
    %v499 = vpop.f32.mrf.mxu0
    %v500 = vadd.f32 0.0, %v499
    %v501 = vpop.f32.mrf.mxu0
    %v502 = vpop.f32.mrf.mxu0
    %v503 = vadd.f32 0.0, %v502
    %v504 = vpop.f32.mrf.mxu0
    %505 = vdwg.mxu0
    %v506 = vadd.f32 %v366, %v492
    %v507 = vadd.f32 %v369, %v495
    %v508 = vadd.f32 %v374, %v500
    %v509 = vadd.f32 %v377, %v503
    %v510 = vld [vmem:[%s2] sm:$0x1]
    %v512 = vlaneseq
    %v513 = vshrl.u32 %v512, 7
    %v514 = vsub.s32 0, %v513
    %v515 = vrot.slane %v510, %v514
    %v517 = vadd.f32 %v506, %v515
    %v518 = vadd.f32 %v507, %v515
    %v519 = vadd.f32 %v508, %v515
    %v520 = vadd.f32 %v509, %v515
    %v521 = vmax.f32 %v517, 0.0
    %v522 = vmax.f32 %v518, 0.0
    %v523 = vmax.f32 %v519, 0.0
    %v524 = vmax.f32 %v520, 0.0
    %525 = vst [vmem:[#allocation2] sm:$0xf] 0
    %526 = vst [vmem:[#allocation2 + $0x4] sm:$0xf] 0
    %527 = vst [vmem:[#allocation2 + $0x10] sm:$0xf] 0
    %528 = vst [vmem:[#allocation2 + $0x14] sm:$0xf] 0
    %v529 = vpack.c.bf16 %v522, %v521
    %v530 = vpack.c.bf16 %v524, %v523
    %v533 = vunpack.c.l.b16 %v529
    %v534 = vunpack.c.h.b16 %v529
    %v535 = vunpack.c.l.b16 %v530
    %v536 = vunpack.c.h.b16 %v530
    %v537 = vpack.c.b16 %v533, %v533
    %v538 = vpack.c.b16 %v534, %v534
    %v539 = vpack.c.b16 %v535, %v535
    %v540 = vpack.c.b16 %v536, %v536
    %545 = vst [vmem:[#allocation2 + $0x8] sm:$0xf] %v537
    %546 = vst [vmem:[#allocation2 + $0xc] sm:$0xf] %v538
    %547 = vst [vmem:[#allocation2 + $0x18] sm:$0xf] %v539
    %548 = vst [vmem:[#allocation2 + $0x1c] sm:$0xf] %v540
    %v549 = vld [vmem:[#allocation2 + $0x4] sm:$0xc]
    %v550 = vld [vmem:[#allocation2 + $0x8] sm:$0xf]
    %v551 = vld [vmem:[#allocation2 + $0xc] sm:$0x3]
    %v552 = vld [vmem:[#allocation2 + $0x14] sm:$0xc]
    %v553 = vld [vmem:[#allocation2 + $0x18] sm:$0xf]
    %v554 = vld [vmem:[#allocation2 + $0x1c] sm:$0x3]
    %v561 = vrot.slane %v549, 6
    %v562 = vrot.slane %v561, 4
    %v563 = vrot.slane %v550, 6
    %v564 = vsel %vm97, %v562, %v563
    %v565 = vrot.slane %v563, 4
    %v566 = vrot.slane %v551, 6
    %v567 = vsel %vm97, %v565, %v566
    %v568 = vrot.slane %v552, 6
    %v569 = vrot.slane %v568, 4
    %v570 = vrot.slane %v553, 6
    %v571 = vsel %vm97, %v569, %v570
    %v572 = vrot.slane %v570, 4
    %v573 = vrot.slane %v554, 6
    %v574 = vsel %vm97, %v572, %v573
    %v575 = vld [vmem:[#allocation8] sm:$0xf]
    %v576 = vld [vmem:[#allocation8 + $0x4] sm:$0xf]
    %v577 = vld [vmem:[#allocation8 + $0x8] sm:$0xf]
    %v578 = vld [vmem:[#allocation8 + $0xc] sm:$0xf]
    %v579 = vld [vmem:[#allocation8 + $0x10] sm:$0xf]
    %v580 = vld [vmem:[#allocation8 + $0x14] sm:$0xf]
    %v581 = vld [vmem:[#allocation8 + $0x18] sm:$0xf]
    %v582 = vld [vmem:[#allocation8 + $0x1c] sm:$0xf]
    %v583 = vld [vmem:[#allocation8 + $0x20] sm:$0xf]
    %v584 = vld [vmem:[#allocation8 + $0x24] sm:$0xf]
    %v585 = vld [vmem:[#allocation8 + $0x28] sm:$0xf]
    %v586 = vld [vmem:[#allocation8 + $0x2c] sm:$0xf]
    %v587 = vld [vmem:[#allocation8 + $0x30] sm:$0xf]
    %v588 = vld [vmem:[#allocation8 + $0x34] sm:$0xf]
    %v589 = vld [vmem:[#allocation8 + $0x38] sm:$0xf]
    %v590 = vld [vmem:[#allocation8 + $0x3c] sm:$0xf]
    %v591 = vld [vmem:[#allocation2 + $0x4] sm:$0x8]
    %v592 = vld [vmem:[#allocation2 + $0xc] sm:$0x7]
    %v593 = vld [vmem:[#allocation2 + $0x14] sm:$0x8]
    %v594 = vld [vmem:[#allocation2 + $0x1c] sm:$0x7]
    %v599 = vrot.slane %v591, 7
    %v600 = vrot.slane %v599, 4
    %v601 = vrot.slane %v550, 7
    %v602 = vsel %vm138, %v600, %v601
    %v603 = vrot.slane %v601, 4
    %v604 = vrot.slane %v592, 7
    %v605 = vsel %vm138, %v603, %v604
    %v606 = vrot.slane %v593, 7
    %v607 = vrot.slane %v606, 4
    %v608 = vrot.slane %v553, 7
    %v609 = vsel %vm138, %v607, %v608
    %v610 = vrot.slane %v608, 4
    %v611 = vrot.slane %v594, 7
    %v612 = vsel %vm138, %v610, %v611
    %s613 = scalar_lea.vmem [#allocation8], 64
    %v614 = vld [vmem:[%s613] sm:$0xf]
    %v615 = vld [vmem:[%s613 + $0x4] sm:$0xf]
    %v616 = vld [vmem:[%s613 + $0x8] sm:$0xf]
    %v617 = vld [vmem:[%s613 + $0xc] sm:$0xf]
    %v618 = vld [vmem:[%s613 + $0x10] sm:$0xf]
    %v619 = vld [vmem:[%s613 + $0x14] sm:$0xf]
    %v620 = vld [vmem:[%s613 + $0x18] sm:$0xf]
    %v621 = vld [vmem:[%s613 + $0x1c] sm:$0xf]
    %v622 = vld [vmem:[%s613 + $0x20] sm:$0xf]
    %v623 = vld [vmem:[%s613 + $0x24] sm:$0xf]
    %v624 = vld [vmem:[%s613 + $0x28] sm:$0xf]
    %v625 = vld [vmem:[%s613 + $0x2c] sm:$0xf]
    %v626 = vld [vmem:[%s613 + $0x30] sm:$0xf]
    %v627 = vld [vmem:[%s613 + $0x34] sm:$0xf]
    %v628 = vld [vmem:[%s613 + $0x38] sm:$0xf]
    %v629 = vld [vmem:[%s613 + $0x3c] sm:$0xf]
    %v630 = vunpack.c.l.b16 %v602
    %v631 = vunpack.c.l.b16 %v605
    %v632 = vunpack.c.l.b16 %v609
    %v633 = vunpack.c.l.b16 %v612
    %v634 = vpack.c.b16 %v631, %v630
    %v635 = vpack.c.b16 %v633, %v632
    %v654 = vunpack.c.l.b16 %v614
    %v655 = vunpack.c.l.b16 %v615
    %v656 = vunpack.c.l.b16 %v616
    %v657 = vunpack.c.l.b16 %v617
    %v658 = vunpack.c.l.b16 %v618
    %v659 = vunpack.c.l.b16 %v619
    %v660 = vunpack.c.l.b16 %v620
    %v661 = vunpack.c.l.b16 %v621
    %v662 = vunpack.c.l.b16 %v622
    %v663 = vunpack.c.l.b16 %v623
    %v664 = vunpack.c.l.b16 %v624
    %v665 = vunpack.c.l.b16 %v625
    %v666 = vunpack.c.l.b16 %v626
    %v667 = vunpack.c.l.b16 %v627
    %v668 = vunpack.c.l.b16 %v628
    %v669 = vunpack.c.l.b16 %v629
    %v670 = vpack.c.b16 %v655, %v654
    %v671 = vpack.c.b16 %v657, %v656
    %v672 = vpack.c.b16 %v659, %v658
    %v673 = vpack.c.b16 %v661, %v660
    %v674 = vpack.c.b16 %v663, %v662
    %v675 = vpack.c.b16 %v665, %v664
    %v676 = vpack.c.b16 %v667, %v666
    %v677 = vpack.c.b16 %v669, %v668
    %686 = vmatprep.subr.bf16.mxu0 0
    %687 = vmatpush1.bf16.msra.mxu0 %v677
    %688 = vmatprep.subr.bf16.mxu0 0
    %689 = vmatpush1.bf16.msra.mxu0 %v676
    %690 = vmatprep.subr.bf16.mxu0 0
    %691 = vmatpush1.bf16.msra.mxu0 %v675
    %692 = vmatprep.subr.bf16.mxu0 0
    %693 = vmatpush1.bf16.msra.mxu0 %v674
    %694 = vmatprep.subr.bf16.mxu0 0
    %695 = vmatpush1.bf16.msra.mxu0 %v673
    %696 = vmatprep.subr.bf16.mxu0 0
    %697 = vmatpush1.bf16.msra.mxu0 %v672
    %698 = vmatprep.subr.bf16.mxu0 0
    %699 = vmatpush1.bf16.msra.mxu0 %v671
    %700 = vmatprep.subr.bf16.mxu0 0
    %701 = vmatpush1.bf16.msra.mxu0 %v670
    %702 = vmatprep.subr.bf16.mxu0 0
    %703 = vmatpush2.bf16.msra.mxu0 0
    %704 = vmatprep.subr.bf16.mxu0 0
    %705 = vmatpush2.bf16.msra.mxu0 0
    %706 = vmatprep.subr.bf16.mxu0 0
    %707 = vmatpush2.bf16.msra.mxu0 0
    %708 = vmatprep.subr.bf16.mxu0 0
    %709 = vmatpush2.bf16.msra.mxu0 0
    %710 = vmatprep.subr.bf16.mxu0 0
    %711 = vmatpush2.bf16.msra.mxu0 0
    %712 = vmatprep.subr.bf16.mxu0 0
    %713 = vmatpush2.bf16.msra.mxu0 0
    %714 = vmatprep.subr.bf16.mxu0 0
    %715 = vmatpush2.bf16.msra.mxu0 0
    %716 = vmatprep.subr.bf16.mxu0 0
    %717 = vmatpush2.bf16.msra.mxu0 0
    %718 = vmatprep.mubr.bf16.mxu0 0
    %719 = vmatmul.mubr.bf16.gmra.mxu0 %v634
    %v720 = vpop.f32.mrf.mxu0
    %v721 = vadd.f32 0.0, %v720
    %v722 = vpop.f32.mrf.mxu0
    %v723 = vpop.f32.mrf.mxu0
    %v724 = vadd.f32 0.0, %v723
    %v725 = vpop.f32.mrf.mxu0
    %726 = vmatprep.mubr.bf16.mxu0 0
    %727 = vmatmul.mubr.bf16.gmra.mxu0 %v635
    %v728 = vpop.f32.mrf.mxu0
    %v729 = vadd.f32 0.0, %v728
    %v730 = vpop.f32.mrf.mxu0
    %v731 = vpop.f32.mrf.mxu0
    %v732 = vadd.f32 0.0, %v731
    %v733 = vpop.f32.mrf.mxu0
    %734 = vdwg.mxu0
    %v735 = vunpack.c.l.b16 %v564
    %v736 = vunpack.c.l.b16 %v567
    %v737 = vunpack.c.l.b16 %v571
    %v738 = vunpack.c.l.b16 %v574
    %v739 = vpack.c.b16 %v736, %v735
    %v740 = vpack.c.b16 %v738, %v737
    %v759 = vunpack.c.l.b16 %v575
    %v760 = vunpack.c.l.b16 %v576
    %v761 = vunpack.c.l.b16 %v577
    %v762 = vunpack.c.l.b16 %v578
    %v763 = vunpack.c.l.b16 %v579
    %v764 = vunpack.c.l.b16 %v580
    %v765 = vunpack.c.l.b16 %v581
    %v766 = vunpack.c.l.b16 %v582
    %v767 = vunpack.c.l.b16 %v583
    %v768 = vunpack.c.l.b16 %v584
    %v769 = vunpack.c.l.b16 %v585
    %v770 = vunpack.c.l.b16 %v586
    %v771 = vunpack.c.l.b16 %v587
    %v772 = vunpack.c.l.b16 %v588
    %v773 = vunpack.c.l.b16 %v589
    %v774 = vunpack.c.l.b16 %v590
    %v775 = vpack.c.b16 %v760, %v759
    %v776 = vpack.c.b16 %v762, %v761
    %v777 = vpack.c.b16 %v764, %v763
    %v778 = vpack.c.b16 %v766, %v765
    %v779 = vpack.c.b16 %v768, %v767
    %v780 = vpack.c.b16 %v770, %v769
    %v781 = vpack.c.b16 %v772, %v771
    %v782 = vpack.c.b16 %v774, %v773
    %791 = vmatprep.subr.bf16.mxu0 0
    %792 = vmatpush1.bf16.msra.mxu0 %v782
    %793 = vmatprep.subr.bf16.mxu0 0
    %794 = vmatpush1.bf16.msra.mxu0 %v781
    %795 = vmatprep.subr.bf16.mxu0 0
    %796 = vmatpush1.bf16.msra.mxu0 %v780
    %797 = vmatprep.subr.bf16.mxu0 0
    %798 = vmatpush1.bf16.msra.mxu0 %v779
    %799 = vmatprep.subr.bf16.mxu0 0
    %800 = vmatpush1.bf16.msra.mxu0 %v778
    %801 = vmatprep.subr.bf16.mxu0 0
    %802 = vmatpush1.bf16.msra.mxu0 %v777
    %803 = vmatprep.subr.bf16.mxu0 0
    %804 = vmatpush1.bf16.msra.mxu0 %v776
    %805 = vmatprep.subr.bf16.mxu0 0
    %806 = vmatpush1.bf16.msra.mxu0 %v775
    %807 = vmatprep.subr.bf16.mxu0 0
    %808 = vmatpush2.bf16.msra.mxu0 0
    %809 = vmatprep.subr.bf16.mxu0 0
    %810 = vmatpush2.bf16.msra.mxu0 0
    %811 = vmatprep.subr.bf16.mxu0 0
    %812 = vmatpush2.bf16.msra.mxu0 0
    %813 = vmatprep.subr.bf16.mxu0 0
    %814 = vmatpush2.bf16.msra.mxu0 0
    %815 = vmatprep.subr.bf16.mxu0 0
    %816 = vmatpush2.bf16.msra.mxu0 0
    %817 = vmatprep.subr.bf16.mxu0 0
    %818 = vmatpush2.bf16.msra.mxu0 0
    %819 = vmatprep.subr.bf16.mxu0 0
    %820 = vmatpush2.bf16.msra.mxu0 0
    %821 = vmatprep.subr.bf16.mxu0 0
    %822 = vmatpush2.bf16.msra.mxu0 0
    %823 = vmatprep.mubr.bf16.mxu0 0
    %824 = vmatmul.mubr.bf16.gmra.mxu0 %v739
    %v825 = vpop.f32.mrf.mxu0
    %v826 = vadd.f32 %v721, %v825
    %v827 = vpop.f32.mrf.mxu0
    %v828 = vpop.f32.mrf.mxu0
    %v829 = vadd.f32 %v724, %v828
    %v830 = vpop.f32.mrf.mxu0
    %831 = vmatprep.mubr.bf16.mxu0 0
    %832 = vmatmul.mubr.bf16.gmra.mxu0 %v740
    %v833 = vpop.f32.mrf.mxu0
    %v834 = vadd.f32 %v729, %v833
    %v835 = vpop.f32.mrf.mxu0
    %v836 = vpop.f32.mrf.mxu0
    %v837 = vadd.f32 %v732, %v836
    %v838 = vpop.f32.mrf.mxu0
    %839 = vdwg.mxu0
    %v840 = vld [vmem:[#allocation2 + $0xc] sm:$0xf]
    %v841 = vld [vmem:[#allocation2 + $0x1c] sm:$0xf]
    %s842 = scalar_lea.vmem [#allocation8], 128
    %v843 = vld [vmem:[%s842] sm:$0xf]
    %v844 = vld [vmem:[%s842 + $0x4] sm:$0xf]
    %v845 = vld [vmem:[%s842 + $0x8] sm:$0xf]
    %v846 = vld [vmem:[%s842 + $0xc] sm:$0xf]
    %v847 = vld [vmem:[%s842 + $0x10] sm:$0xf]
    %v848 = vld [vmem:[%s842 + $0x14] sm:$0xf]
    %v849 = vld [vmem:[%s842 + $0x18] sm:$0xf]
    %v850 = vld [vmem:[%s842 + $0x1c] sm:$0xf]
    %v851 = vld [vmem:[%s842 + $0x20] sm:$0xf]
    %v852 = vld [vmem:[%s842 + $0x24] sm:$0xf]
    %v853 = vld [vmem:[%s842 + $0x28] sm:$0xf]
    %v854 = vld [vmem:[%s842 + $0x2c] sm:$0xf]
    %v855 = vld [vmem:[%s842 + $0x30] sm:$0xf]
    %v856 = vld [vmem:[%s842 + $0x34] sm:$0xf]
    %v857 = vld [vmem:[%s842 + $0x38] sm:$0xf]
    %v858 = vld [vmem:[%s842 + $0x3c] sm:$0xf]
    %v861 = vunpack.c.l.b16 %v550
    %v862 = vunpack.c.l.b16 %v840
    %v863 = vunpack.c.l.b16 %v553
    %v864 = vunpack.c.l.b16 %v841
    %v865 = vpack.c.b16 %v862, %v861
    %v866 = vpack.c.b16 %v864, %v863
    %v885 = vunpack.c.l.b16 %v843
    %v886 = vunpack.c.l.b16 %v844
    %v887 = vunpack.c.l.b16 %v845
    %v888 = vunpack.c.l.b16 %v846
    %v889 = vunpack.c.l.b16 %v847
    %v890 = vunpack.c.l.b16 %v848
    %v891 = vunpack.c.l.b16 %v849
    %v892 = vunpack.c.l.b16 %v850
    %v893 = vunpack.c.l.b16 %v851
    %v894 = vunpack.c.l.b16 %v852
    %v895 = vunpack.c.l.b16 %v853
    %v896 = vunpack.c.l.b16 %v854
    %v897 = vunpack.c.l.b16 %v855
    %v898 = vunpack.c.l.b16 %v856
    %v899 = vunpack.c.l.b16 %v857
    %v900 = vunpack.c.l.b16 %v858
    %v901 = vpack.c.b16 %v886, %v885
    %v902 = vpack.c.b16 %v888, %v887
    %v903 = vpack.c.b16 %v890, %v889
    %v904 = vpack.c.b16 %v892, %v891
    %v905 = vpack.c.b16 %v894, %v893
    %v906 = vpack.c.b16 %v896, %v895
    %v907 = vpack.c.b16 %v898, %v897
    %v908 = vpack.c.b16 %v900, %v899
    %917 = vmatprep.subr.bf16.mxu0 0
    %918 = vmatpush1.bf16.msra.mxu0 %v908
    %919 = vmatprep.subr.bf16.mxu0 0
    %920 = vmatpush1.bf16.msra.mxu0 %v907
    %921 = vmatprep.subr.bf16.mxu0 0
    %922 = vmatpush1.bf16.msra.mxu0 %v906
    %923 = vmatprep.subr.bf16.mxu0 0
    %924 = vmatpush1.bf16.msra.mxu0 %v905
    %925 = vmatprep.subr.bf16.mxu0 0
    %926 = vmatpush1.bf16.msra.mxu0 %v904
    %927 = vmatprep.subr.bf16.mxu0 0
    %928 = vmatpush1.bf16.msra.mxu0 %v903
    %929 = vmatprep.subr.bf16.mxu0 0
    %930 = vmatpush1.bf16.msra.mxu0 %v902
    %931 = vmatprep.subr.bf16.mxu0 0
    %932 = vmatpush1.bf16.msra.mxu0 %v901
    %933 = vmatprep.subr.bf16.mxu0 0
    %934 = vmatpush2.bf16.msra.mxu0 0
    %935 = vmatprep.subr.bf16.mxu0 0
    %936 = vmatpush2.bf16.msra.mxu0 0
    %937 = vmatprep.subr.bf16.mxu0 0
    %938 = vmatpush2.bf16.msra.mxu0 0
    %939 = vmatprep.subr.bf16.mxu0 0
    %940 = vmatpush2.bf16.msra.mxu0 0
    %941 = vmatprep.subr.bf16.mxu0 0
    %942 = vmatpush2.bf16.msra.mxu0 0
    %943 = vmatprep.subr.bf16.mxu0 0
    %944 = vmatpush2.bf16.msra.mxu0 0
    %945 = vmatprep.subr.bf16.mxu0 0
    %946 = vmatpush2.bf16.msra.mxu0 0
    %947 = vmatprep.subr.bf16.mxu0 0
    %948 = vmatpush2.bf16.msra.mxu0 0
    %949 = vmatprep.mubr.bf16.mxu0 0
    %950 = vmatmul.mubr.bf16.gmra.mxu0 %v865
    %v951 = vpop.f32.mrf.mxu0
    %v952 = vadd.f32 0.0, %v951
    %v953 = vpop.f32.mrf.mxu0
    %v954 = vpop.f32.mrf.mxu0
    %v955 = vadd.f32 0.0, %v954
    %v956 = vpop.f32.mrf.mxu0
    %957 = vmatprep.mubr.bf16.mxu0 0
    %958 = vmatmul.mubr.bf16.gmra.mxu0 %v866
    %v959 = vpop.f32.mrf.mxu0
    %v960 = vadd.f32 0.0, %v959
    %v961 = vpop.f32.mrf.mxu0
    %v962 = vpop.f32.mrf.mxu0
    %v963 = vadd.f32 0.0, %v962
    %v964 = vpop.f32.mrf.mxu0
    %965 = vdwg.mxu0
    %v966 = vadd.f32 %v826, %v952
    %v967 = vadd.f32 %v829, %v955
    %v968 = vadd.f32 %v834, %v960
    %v969 = vadd.f32 %v837, %v963
    %v970 = vld [vmem:[%s4] sm:$0x1]
    %v972 = vlaneseq
    %v973 = vshrl.u32 %v972, 7
    %v974 = vsub.s32 0, %v973
    %v975 = vrot.slane %v970, %v974
    %v977 = vadd.f32 %v966, %v975
    %v978 = vadd.f32 %v967, %v975
    %v979 = vadd.f32 %v968, %v975
    %v980 = vadd.f32 %v969, %v975
    %v981 = vmax.f32 %v977, 0.0
    %v982 = vmax.f32 %v978, 0.0
    %v983 = vmax.f32 %v979, 0.0
    %v984 = vmax.f32 %v980, 0.0
    %v985 = vld [vmem:[#allocation3 + $0x8] sm:$0xf]
    %v986 = vld [vmem:[#allocation3 + $0xc] sm:$0xf]
    %v987 = vld [vmem:[#allocation3 + $0x18] sm:$0xf]
    %v988 = vld [vmem:[#allocation3 + $0x1c] sm:$0xf]
    %v989 = vld [vmem:[#allocation9] sm:$0xf]
    %v990 = vld [vmem:[#allocation9 + $0x4] sm:$0xf]
    %v991 = vld [vmem:[#allocation9 + $0x8] sm:$0xf]
    %v992 = vld [vmem:[#allocation9 + $0xc] sm:$0xf]
    %v993 = vld [vmem:[#allocation9 + $0x10] sm:$0xf]
    %v994 = vld [vmem:[#allocation9 + $0x14] sm:$0xf]
    %v995 = vld [vmem:[#allocation9 + $0x18] sm:$0xf]
    %v996 = vld [vmem:[#allocation9 + $0x1c] sm:$0xf]
    %v997 = vld [vmem:[#allocation9 + $0x20] sm:$0xf]
    %v998 = vld [vmem:[#allocation9 + $0x24] sm:$0xf]
    %v999 = vld [vmem:[#allocation9 + $0x28] sm:$0xf]
    %v1000 = vld [vmem:[#allocation9 + $0x2c] sm:$0xf]
    %v1001 = vld [vmem:[#allocation9 + $0x30] sm:$0xf]
    %v1002 = vld [vmem:[#allocation9 + $0x34] sm:$0xf]
    %v1003 = vld [vmem:[#allocation9 + $0x38] sm:$0xf]
    %v1004 = vld [vmem:[#allocation9 + $0x3c] sm:$0xf]
    %v1005 = vld [vmem:[%s6] sm:$0x1]
    %v1007 = vlaneseq
    %v1008 = vshrl.u32 %v1007, 7
    %v1009 = vsub.s32 0, %v1008
    %v1010 = vrot.slane %v1005, %v1009
    %v1016 = vunpack.c.l.b16 %v985
    %v1017 = vunpack.c.l.b16 %v986
    %v1018 = vunpack.c.l.b16 %v987
    %v1019 = vunpack.c.l.b16 %v988
    %v1020 = vpack.c.b16 %v1017, %v1016
    %v1021 = vpack.c.b16 %v1019, %v1018
    %v1040 = vunpack.c.l.b16 %v989
    %v1041 = vunpack.c.l.b16 %v990
    %v1042 = vunpack.c.l.b16 %v991
    %v1043 = vunpack.c.l.b16 %v992
    %v1044 = vunpack.c.l.b16 %v993
    %v1045 = vunpack.c.l.b16 %v994
    %v1046 = vunpack.c.l.b16 %v995
    %v1047 = vunpack.c.l.b16 %v996
    %v1048 = vunpack.c.l.b16 %v997
    %v1049 = vunpack.c.l.b16 %v998
    %v1050 = vunpack.c.l.b16 %v999
    %v1051 = vunpack.c.l.b16 %v1000
    %v1052 = vunpack.c.l.b16 %v1001
    %v1053 = vunpack.c.l.b16 %v1002
    %v1054 = vunpack.c.l.b16 %v1003
    %v1055 = vunpack.c.l.b16 %v1004
    %v1056 = vpack.c.b16 %v1041, %v1040
    %v1057 = vpack.c.b16 %v1043, %v1042
    %v1058 = vpack.c.b16 %v1045, %v1044
    %v1059 = vpack.c.b16 %v1047, %v1046
    %v1060 = vpack.c.b16 %v1049, %v1048
    %v1061 = vpack.c.b16 %v1051, %v1050
    %v1062 = vpack.c.b16 %v1053, %v1052
    %v1063 = vpack.c.b16 %v1055, %v1054
    %1072 = vmatprep.subr.bf16.mxu0 0
    %1073 = vmatpush1.bf16.msra.mxu0 %v1063
    %1074 = vmatprep.subr.bf16.mxu0 0
    %1075 = vmatpush1.bf16.msra.mxu0 %v1062
    %1076 = vmatprep.subr.bf16.mxu0 0
    %1077 = vmatpush1.bf16.msra.mxu0 %v1061
    %1078 = vmatprep.subr.bf16.mxu0 0
    %1079 = vmatpush1.bf16.msra.mxu0 %v1060
    %1080 = vmatprep.subr.bf16.mxu0 0
    %1081 = vmatpush1.bf16.msra.mxu0 %v1059
    %1082 = vmatprep.subr.bf16.mxu0 0
    %1083 = vmatpush1.bf16.msra.mxu0 %v1058
    %1084 = vmatprep.subr.bf16.mxu0 0
    %1085 = vmatpush1.bf16.msra.mxu0 %v1057
    %1086 = vmatprep.subr.bf16.mxu0 0
    %1087 = vmatpush1.bf16.msra.mxu0 %v1056
    %1088 = vmatprep.subr.bf16.mxu0 0
    %1089 = vmatpush2.bf16.msra.mxu0 0
    %1090 = vmatprep.subr.bf16.mxu0 0
    %1091 = vmatpush2.bf16.msra.mxu0 0
    %1092 = vmatprep.subr.bf16.mxu0 0
    %1093 = vmatpush2.bf16.msra.mxu0 0
    %1094 = vmatprep.subr.bf16.mxu0 0
    %1095 = vmatpush2.bf16.msra.mxu0 0
    %1096 = vmatprep.subr.bf16.mxu0 0
    %1097 = vmatpush2.bf16.msra.mxu0 0
    %1098 = vmatprep.subr.bf16.mxu0 0
    %1099 = vmatpush2.bf16.msra.mxu0 0
    %1100 = vmatprep.subr.bf16.mxu0 0
    %1101 = vmatpush2.bf16.msra.mxu0 0
    %1102 = vmatprep.subr.bf16.mxu0 0
    %1103 = vmatpush2.bf16.msra.mxu0 0
    %1104 = vmatprep.mubr.bf16.mxu0 0
    %1105 = vmatmul.mubr.bf16.gmra.mxu0 %v1020
    %v1106 = vpop.f32.mrf.mxu0
    %v1107 = vadd.f32 %v1010, %v1106
    %v1108 = vpop.f32.mrf.mxu0
    %v1109 = vpop.f32.mrf.mxu0
    %v1110 = vadd.f32 %v1010, %v1109
    %v1111 = vpop.f32.mrf.mxu0
    %1112 = vmatprep.mubr.bf16.mxu0 0
    %1113 = vmatmul.mubr.bf16.gmra.mxu0 %v1021
    %v1114 = vpop.f32.mrf.mxu0
    %v1115 = vadd.f32 %v1010, %v1114
    %v1116 = vpop.f32.mrf.mxu0
    %v1117 = vpop.f32.mrf.mxu0
    %v1118 = vadd.f32 %v1010, %v1117
    %v1119 = vpop.f32.mrf.mxu0
    %1120 = vdwg.mxu0
    %v1121 = vadd.f32 %v981, %v1107
    %v1122 = vadd.f32 %v982, %v1110
    %v1123 = vadd.f32 %v983, %v1115
    %v1124 = vadd.f32 %v984, %v1118
    %v1125 = vmax.f32 %v1121, 0.0
    %v1126 = vmax.f32 %v1122, 0.0
    %v1127 = vmax.f32 %v1123, 0.0
    %v1128 = vmax.f32 %v1124, 0.0
    %1129 = vst [vmem:[#allocation11] sm:$0xff] %v1125
    %1130 = vst [vmem:[#allocation11 + $0x8] sm:$0xff] %v1126
    %1131 = vst [vmem:[#allocation11 + $0x10] sm:$0xff] %v1127
    %1132 = vst [vmem:[#allocation11 + $0x18] sm:$0xff] %v1128
    // Predicated region
    $region46: #{tpu_custom_call.1} parent=1 // pred_check
      _
    $region47: #{tpu_custom_call.1} parent=1 // pred_check_branch
      %1134 = sbr.rel (0) target = $region49
    $region48: #{tpu_custom_call.1} parent=1 // pred_region
      %s1136 = ssub.s32 512, 512
      %1137 = vsyncadd [#allocation5], %s1136
      %s1138 = sshll.u32 [#allocation11], 4
      %s1139 = int_to_ptr.vmem [resolvable:$true] %s1138
      %1144 = dma.vmem_to_hbm [thread:$0]  %s1139, 512, %s7, [#allocation5], 128, 128, 8
    $region49: #{tpu_custom_call.1} parent=1 // pred_fallthru
      _
    // Predicated region
    $region50: #{tpu_custom_call.1} parent=1 // pred_check
      _
    $region51: #{tpu_custom_call.1} parent=1 // pred_check_branch
      %1146 = sbr.rel (0) target = $region53
    $region52: #{tpu_custom_call.1} parent=1 // pred_region
      %1147 = dma.done [#allocation5], 512
    $region53: #{tpu_custom_call.1} parent=1 // pred_fallthru
      _
    %1148 = vsyncpa [#allocation4], 1
    %1149 = vsyncpa [#allocation7], 1
    %1150 = vsyncpa [#allocation10], 1
    %1151 = vsyncpa [#allocation5], 1

</llo_original>
